<compile_context>
chip_gen: v7x
topology: tpu7x:2x2x1
jax: 0.10.0
libtpu: 0.0.40
codegen_flags: <defaults>
</compile_context>

<pallas_src>
import functools
import math

import numpy as np
import jax
import jax.numpy as jnp
from jax import lax
from jax.experimental import pallas as pl
from jax.experimental.pallas import tpu as pltpu


_LOGITS_TILE_BYTES = 2 << 20      # ~2 MiB of logits per pipeline buffer
_MAX_TILE_C = 2048                # class-axis tile for vocab-scale C (multiple of 128)


def _sublane_pack(dtype_bytes):
    return {4: 8, 2: 16, 1: 32}.get(dtype_bytes, 8)


def _choose_tiles(n, c, dtype_bytes):
    """Pick (tile_n, tile_c) targeting ~_LOGITS_TILE_BYTES per logits buffer."""
    tile_c = c if c <= _MAX_TILE_C else _MAX_TILE_C
    pack = _sublane_pack(dtype_bytes)
    tile_n = _LOGITS_TILE_BYTES // (tile_c * dtype_bytes)
    tile_n = max(pack, (tile_n // pack) * pack)
    if tile_n >= n:
        tile_n = n                # single batch tile: block == full dim is always legal
    return tile_n, tile_c


def _weighted_ce_kernel(x_ref, tgt_ref, wt_ref, out_ref,
                        m_run, s_run, xt_run, num_acc, den_acc,
                        *, n_total, c_total, tile_n, tile_c):
    i = pl.program_id(0)                       # batch tile
    j = pl.program_id(1)                       # class tile (innermost reduction)
    last_i = pl.num_programs(0) - 1
    last_j = pl.num_programs(1) - 1

    @pl.when((i == 0) & (j == 0))
    def _init_batch_accumulators():
        num_acc[...] = jnp.zeros_like(num_acc)
        den_acc[...] = jnp.zeros_like(den_acc)

    @pl.when(j == 0)
    def _init_row_state():
        m_run[...] = jnp.full_like(m_run, -jnp.inf)
        s_run[...] = jnp.zeros_like(s_run)
        xt_run[...] = jnp.zeros_like(xt_run)

    x = x_ref[...].astype(jnp.float32)         # (tile_n, tile_c), f32 compute
    t = tgt_ref[...]                           # (tile_n, 1) int32 labels
    tn, tc = x.shape

    # Column validity for a partial last class tile.
    col_idx = j * tile_c + lax.broadcasted_iota(jnp.int32, (tn, tc), 1)
    x_m = jnp.where(col_idx < c_total, x, -jnp.inf)

    # Online (flash-style) log-sum-exp over the class axis.
    m_old = m_run[...]
    m_new = jnp.maximum(m_old, jnp.max(x_m, axis=-1, keepdims=True))
    s_run[...] = (s_run[...] * jnp.exp(m_old - m_new)
                  + jnp.sum(jnp.exp(x_m - m_new), axis=-1, keepdims=True))
    m_run[...] = m_new

    # Gather x[row, target] restricted to this class tile (iota == target mask).
    xt_run[...] += jnp.sum(jnp.where(col_idx == t, x, 0.0), axis=-1, keepdims=True)

    @pl.when(j == last_j)
    def _accumulate_batch_tile():
        # Rows beyond the true batch size (partial last batch tile) are masked out.
        row_idx = i * tile_n + lax.broadcasted_iota(jnp.int32, (tn, 1), 0)
        row_valid = row_idx < n_total
        nll = (m_run[...] + jnp.log(s_run[...])) - xt_run[...]       # (tile_n, 1)
        w_t = wt_ref[...]                                            # weight[target], hoisted
        num_acc[...] += jnp.where(row_valid, w_t * nll, 0.0)
        den_acc[...] += jnp.where(row_valid, w_t, 0.0)

    @pl.when((i == last_i) & (j == last_j))
    def _finalize():
        num = jnp.sum(num_acc[...], axis=0, keepdims=True)           # (1, 1)
        den = jnp.sum(den_acc[...], axis=0, keepdims=True)           # (1, 1)
        out_ref[...] = num / den      # den == 0 iff all selected weights are 0 (matches PyTorch NaN)


def weighted_cross_entropy(x, target, weight, *, tile_n=None, tile_c=None):
    """x: (N, C) f32/bf16 logits, target: (N,) int, weight: (C,) f32 -> scalar f32.

    Matches F.cross_entropy(x, target, weight=weight) with reduction='mean':
        sum_i weight[t_i] * nll_i / sum_i weight[t_i]
    """
    n, c = x.shape
    dtype_bytes = jnp.dtype(x.dtype).itemsize
    auto_n, auto_c = _choose_tiles(n, c, dtype_bytes)
    tile_c = auto_c if tile_c is None else min(tile_c, c)
    tile_n = auto_n if tile_n is None else tile_n

    pack = _sublane_pack(dtype_bytes)
    if tile_n >= n:
        tile_n = n
    else:
        tile_n = max(pack, (tile_n // pack) * pack)
    if tile_c >= c:
        tile_c = c

    grid = (pl.cdiv(n, tile_n), pl.cdiv(c, tile_c))

    tgt2d = target.reshape(n, 1).astype(jnp.int32)
    # Hoisted class-weight gather (trivial XLA gather on an (N,) array).
    w_t2d = weight.astype(jnp.float32)[target].reshape(n, 1)

    kernel = functools.partial(_weighted_ce_kernel, n_total=n, c_total=c,
                               tile_n=tile_n, tile_c=tile_c)

    # Double-buffered logits + intermediates, with headroom; capped at v7x's 64 MiB.
    vmem_limit = int(min(64 << 20,
                         max(32 << 20, 8 * tile_n * tile_c * dtype_bytes + (2 << 20))))

    cost = pl.CostEstimate(
        flops=6 * n * c,
        transcendentals=n * c + n,
        bytes_accessed=n * c * dtype_bytes + 2 * n * 4 + 4,
    )

    out = pl.pallas_call(
        kernel,
        out_shape=jax.ShapeDtypeStruct((1, 1), jnp.float32),
        grid=grid,
        in_specs=[
            pl.BlockSpec((tile_n, tile_c), lambda i, j: (i, j)),   # logits tile
            pl.BlockSpec((tile_n, 1), lambda i, j: (i, 0)),        # targets tile
            pl.BlockSpec((tile_n, 1), lambda i, j: (i, 0)),        # weight[target] tile
        ],
        out_specs=pl.BlockSpec((1, 1), lambda i, j: (0, 0)),       # scalar, written once
        scratch_shapes=[
            pltpu.VMEM((tile_n, 1), jnp.float32),   # running row max
            pltpu.VMEM((tile_n, 1), jnp.float32),   # running sum(exp)
            pltpu.VMEM((tile_n, 1), jnp.float32),   # gathered x[target]
            pltpu.VMEM((tile_n, 1), jnp.float32),   # running numerator
            pltpu.VMEM((tile_n, 1), jnp.float32),   # running denominator
        ],
        compiler_params=pltpu.CompilerParams(
            dimension_semantics=("arbitrary", "arbitrary"),
            vmem_limit_bytes=vmem_limit),
        cost_estimate=cost,
    )(x, tgt2d, w_t2d)
    return out[0, 0]


def make_class_weights(num_class_list, extra_weight=None, power=1.0):
    # Deterministic emulation of BaseLoss.reset_epoch(scheduler='re_weight')
    # (host-side numpy, exactly like the PyTorch module).
    ncl = np.asarray(num_class_list, dtype=np.float64)
    c = len(ncl)
    if extra_weight is None:
        extra_weight = np.ones(c, dtype=np.float64)
    per = 1.0 / ncl
    per = per * extra_weight
    per = np.array([math.pow(v, power) for v in per])
    per = per / np.sum(per) * c
    return jnp.asarray(per, dtype=jnp.float32)


def _ref_weighted_ce(x, target, weight):
    x32 = x.astype(jnp.float32)
    logp = jax.nn.log_softmax(x32, axis=-1)
    nll = -jnp.take_along_axis(logp, target[:, None], axis=-1)[:, 0]
    w_t = weight[target]
    return jnp.sum(w_t * nll) / jnp.sum(w_t)


if __name__ == "__main__":
    key = jax.random.PRNGKey(0)
    C = 16

    # synthetic imbalanced class counts -> re_weight scheduler weights
    num_class_list = [100, 90, 80, 70, 60, 50, 40, 30, 25, 20, 15, 12, 10, 8, 5, 3]
    weight = make_class_weights(num_class_list, power=1.0)

    # --- test 1: small batch, single block, f32 logits ---
    N1 = 8
    kx, kt, key = jax.random.split(key, 3)
    x1 = jax.random.normal(kx, (N1, C), dtype=jnp.float32)
    t1 = jax.random.randint(kt, (N1,), 0, C, dtype=jnp.int32)
    loss1 = jax.block_until_ready(weighted_cross_entropy(x1, t1, weight))
    ref1 = _ref_weighted_ce(x1, t1, weight)
    assert jnp.allclose(loss1, ref1, rtol=1e-5, atol=1e-5), (loss1, ref1)

    # --- test 2: batch-tiled (grid_n=3) with a partial last tile, f32 logits ---
    N2 = 20
    kx, kt, key = jax.random.split(key, 3)
    x2 = jax.random.normal(kx, (N2, C), dtype=jnp.float32)
    t2 = jax.random.randint(kt, (N2,), 0, C, dtype=jnp.int32)
    loss2 = jax.block_until_ready(weighted_cross_entropy(x2, t2, weight, tile_n=8))
    ref2 = _ref_weighted_ce(x2, t2, weight)
    assert jnp.allclose(loss2, ref2, rtol=1e-5, atol=1e-5), (loss2, ref2)

    # --- test 3: bf16 logits DMA'd as-is, upcast to f32 inside the kernel ---
    x3 = x1.astype(jnp.bfloat16)
    loss3 = jax.block_until_ready(weighted_cross_entropy(x3, t1, weight))
    ref3 = _ref_weighted_ce(x3, t1, weight)   # same bf16 inputs, f32 compute
    assert jnp.allclose(loss3, ref3, rtol=1e-4, atol=1e-4), (loss3, ref3)

    # --- test 4: 2-D grid (batch + class tiling), partial tiles on both axes,
    #             exercising the online-LSE path (C=200, tile_c=128 -> grid_c=2) ---
    C4, N4 = 200, 20
    weight4 = make_class_weights(np.arange(3, 3 + C4), power=1.0)
    kx, kt, key = jax.random.split(key, 3)
    x4 = jax.random.normal(kx, (N4, C4), dtype=jnp.float32)
    t4 = jax.random.randint(kt, (N4,), 0, C4, dtype=jnp.int32)
    loss4 = jax.block_until_ready(
        weighted_cross_entropy(x4, t4, weight4, tile_n=8, tile_c=128))
    ref4 = _ref_weighted_ce(x4, t4, weight4)
    assert jnp.allclose(loss4, ref4, rtol=1e-5, atol=1e-5), (loss4, ref4)

    print("KERNEL_OK")
</pallas_src>

<mosaic_0001>
module attributes {stable_mosaic.version = 11 : i64} {
  func.func @_weighted_ce_kernel(%arg0: i32, %arg1: i32, %arg2: memref<8x16xf32, #tpu.memory_space<vmem>>, %arg3: memref<8x1xi32, #tpu.memory_space<vmem>>, %arg4: memref<8x1xf32, #tpu.memory_space<vmem>>, %arg5: memref<1x1xf32, #tpu.memory_space<vmem>>, %arg6: memref<8x1xf32, #tpu.memory_space<vmem>>, %arg7: memref<8x1xf32, #tpu.memory_space<vmem>>, %arg8: memref<8x1xf32, #tpu.memory_space<vmem>>, %arg9: memref<8x1xf32, #tpu.memory_space<vmem>>, %arg10: memref<8x1xf32, #tpu.memory_space<vmem>>) attributes {dimension_semantics = [#tpu.dimension_semantics<arbitrary>, #tpu.dimension_semantics<arbitrary>], iteration_bounds = array<i64: 1, 1>, scalar_prefetch = 0 : i64, scratch_operands = 5 : i64, tpu.core_type = #tpu.core_type<tc>, window_params = [{transform_indices = @transform_0, window_bounds = array<i64: 8, 16>}, {transform_indices = @transform_1, window_bounds = array<i64: 8, 1>}, {transform_indices = @transform_2, window_bounds = array<i64: 8, 1>}, {pipeline_mode = #tpu.pipeline_mode<synchronous>, transform_indices = @transform_3, window_bounds = array<i64: 1, 1>}]} {
    %c0_i32 = arith.constant 0 : i32
    %0 = arith.cmpi eq, %arg0, %c0_i32 : i32
    %c0_i32_0 = arith.constant 0 : i32
    %1 = arith.cmpi eq, %arg1, %c0_i32_0 : i32
    %2 = arith.andi %0, %1 : i1
    %3 = arith.extui %2 : i1 to i32
    %c0_i32_1 = arith.constant 0 : i32
    %4 = arith.cmpi ne, %3, %c0_i32_1 : i32
    scf.if %4 {
      %cst_29 = arith.constant 0.000000e+00 : f32
      %51 = vector.broadcast %cst_29 : f32 to vector<8x1xf32>
      %c0_30 = arith.constant 0 : index
      %c0_31 = arith.constant 0 : index
      %52 = vector.load %arg9[%c0_30, %c0_31] : memref<8x1xf32, #tpu.memory_space<vmem>>, vector<8x1xf32>
      tpu.vector_store %arg9[%c0_30, %c0_31], %51 {strides = array<i32>} : memref<8x1xf32, #tpu.memory_space<vmem>>, vector<8x1xf32>,
      %cst_32 = arith.constant 0.000000e+00 : f32
      %53 = vector.broadcast %cst_32 : f32 to vector<8x1xf32>
      %c0_33 = arith.constant 0 : index
      %c0_34 = arith.constant 0 : index
      %54 = vector.load %arg10[%c0_33, %c0_34] : memref<8x1xf32, #tpu.memory_space<vmem>>, vector<8x1xf32>
      tpu.vector_store %arg10[%c0_33, %c0_34], %53 {strides = array<i32>} : memref<8x1xf32, #tpu.memory_space<vmem>>, vector<8x1xf32>,
    } else {
    }
    %c0_i32_2 = arith.constant 0 : i32
    %5 = arith.cmpi eq, %arg1, %c0_i32_2 : i32
    %6 = arith.extui %5 : i1 to i32
    %c0_i32_3 = arith.constant 0 : i32
    %7 = arith.cmpi ne, %6, %c0_i32_3 : i32
    scf.if %7 {
      %cst_29 = arith.constant 0xFF800000 : f32
      %51 = vector.broadcast %cst_29 : f32 to vector<8x1xf32>
      %c0_30 = arith.constant 0 : index
      %c0_31 = arith.constant 0 : index
      %52 = vector.load %arg6[%c0_30, %c0_31] : memref<8x1xf32, #tpu.memory_space<vmem>>, vector<8x1xf32>
      tpu.vector_store %arg6[%c0_30, %c0_31], %51 {strides = array<i32>} : memref<8x1xf32, #tpu.memory_space<vmem>>, vector<8x1xf32>,
      %cst_32 = arith.constant 0.000000e+00 : f32
      %53 = vector.broadcast %cst_32 : f32 to vector<8x1xf32>
      %c0_33 = arith.constant 0 : index
      %c0_34 = arith.constant 0 : index
      %54 = vector.load %arg7[%c0_33, %c0_34] : memref<8x1xf32, #tpu.memory_space<vmem>>, vector<8x1xf32>
      tpu.vector_store %arg7[%c0_33, %c0_34], %53 {strides = array<i32>} : memref<8x1xf32, #tpu.memory_space<vmem>>, vector<8x1xf32>,
      %cst_35 = arith.constant 0.000000e+00 : f32
      %55 = vector.broadcast %cst_35 : f32 to vector<8x1xf32>
      %c0_36 = arith.constant 0 : index
      %c0_37 = arith.constant 0 : index
      %56 = vector.load %arg8[%c0_36, %c0_37] : memref<8x1xf32, #tpu.memory_space<vmem>>, vector<8x1xf32>
      tpu.vector_store %arg8[%c0_36, %c0_37], %55 {strides = array<i32>} : memref<8x1xf32, #tpu.memory_space<vmem>>, vector<8x1xf32>,
    } else {
    }
    %c0 = arith.constant 0 : index
    %c0_4 = arith.constant 0 : index
    %8 = vector.load %arg2[%c0, %c0_4] : memref<8x16xf32, #tpu.memory_space<vmem>>, vector<8x16xf32>
    %c0_5 = arith.constant 0 : index
    %c0_6 = arith.constant 0 : index
    %9 = vector.load %arg3[%c0_5, %c0_6] : memref<8x1xi32, #tpu.memory_space<vmem>>, vector<8x1xi32>
    %c16_i32 = arith.constant 16 : i32
    %10 = arith.muli %arg1, %c16_i32 : i32
    %11 = tpu.iota {dimensions = array<i32: 1>} : vector<8x16xi32>
    %12 = vector.broadcast %10 : i32 to vector<8x16xi32>
    %13 = arith.addi %12, %11 : vector<8x16xi32>
    %c16_i32_7 = arith.constant 16 : i32
    %14 = vector.broadcast %c16_i32_7 : i32 to vector<8x16xi32>
    %15 = arith.cmpi slt, %13, %14 : vector<8x16xi32>
    %cst = arith.constant 0xFF800000 : f32
    %16 = vector.broadcast %cst : f32 to vector<8x16xf32>
    %17 = arith.select %15, %8, %16 : vector<8x16xi1>, vector<8x16xf32>
    %c0_8 = arith.constant 0 : index
    %c0_9 = arith.constant 0 : index
    %18 = vector.load %arg6[%c0_8, %c0_9] : memref<8x1xf32, #tpu.memory_space<vmem>>, vector<8x1xf32>
    %cst_10 = arith.constant dense<0xFF800000> : vector<8xf32>
    %19 = vector.multi_reduction <maximumf>, %17, %cst_10 [1] : vector<8x16xf32> to vector<8xf32>
    %20 = vector.shape_cast %19 : vector<8xf32> to vector<8x1xf32>
    %21 = arith.maximumf %18, %20 : vector<8x1xf32>
    %c0_11 = arith.constant 0 : index
    %c0_12 = arith.constant 0 : index
    %22 = vector.load %arg7[%c0_11, %c0_12] : memref<8x1xf32, #tpu.memory_space<vmem>>, vector<8x1xf32>
    %23 = arith.subf %18, %21 : vector<8x1xf32>
    %24 = math.exp %23 : vector<8x1xf32>
    %25 = arith.mulf %22, %24 : vector<8x1xf32>
    %26 = vector.broadcast %21 : vector<8x1xf32> to vector<8x16xf32>
    %27 = arith.subf %17, %26 : vector<8x16xf32>
    %28 = math.exp %27 : vector<8x16xf32>
    %cst_13 = arith.constant dense<0.000000e+00> : vector<8xf32>
    %29 = vector.multi_reduction <add>, %28, %cst_13 [1] : vector<8x16xf32> to vector<8xf32>
    %30 = vector.shape_cast %29 : vector<8xf32> to vector<8x1xf32>
    %31 = arith.addf %25, %30 : vector<8x1xf32>
    %c0_14 = arith.constant 0 : index
    %c0_15 = arith.constant 0 : index
    %32 = vector.load %arg7[%c0_14, %c0_15] : memref<8x1xf32, #tpu.memory_space<vmem>>, vector<8x1xf32>
    tpu.vector_store %arg7[%c0_14, %c0_15], %31 {strides = array<i32>} : memref<8x1xf32, #tpu.memory_space<vmem>>, vector<8x1xf32>,
    %c0_16 = arith.constant 0 : index
    %c0_17 = arith.constant 0 : index
    %33 = vector.load %arg6[%c0_16, %c0_17] : memref<8x1xf32, #tpu.memory_space<vmem>>, vector<8x1xf32>
    tpu.vector_store %arg6[%c0_16, %c0_17], %21 {strides = array<i32>} : memref<8x1xf32, #tpu.memory_space<vmem>>, vector<8x1xf32>,
    %c0_18 = arith.constant 0 : index
    %c0_19 = arith.constant 0 : index
    %34 = vector.load %arg8[%c0_18, %c0_19] : memref<8x1xf32, #tpu.memory_space<vmem>>, vector<8x1xf32>
    %35 = vector.broadcast %9 : vector<8x1xi32> to vector<8x16xi32>
    %36 = arith.cmpi eq, %13, %35 : vector<8x16xi32>
    %cst_20 = arith.constant 0.000000e+00 : f32
    %37 = vector.broadcast %cst_20 : f32 to vector<8x16xf32>
    %38 = arith.select %36, %8, %37 : vector<8x16xi1>, vector<8x16xf32>
    %cst_21 = arith.constant dense<0.000000e+00> : vector<8xf32>
    %39 = vector.multi_reduction <add>, %38, %cst_21 [1] : vector<8x16xf32> to vector<8xf32>
    %40 = vector.shape_cast %39 : vector<8xf32> to vector<8x1xf32>
    %41 = arith.addf %34, %40 : vector<8x1xf32>
    %c0_22 = arith.constant 0 : index
    %c0_23 = arith.constant 0 : index
    %42 = vector.load %arg8[%c0_22, %c0_23] : memref<8x1xf32, #tpu.memory_space<vmem>>, vector<8x1xf32>
    tpu.vector_store %arg8[%c0_22, %c0_23], %41 {strides = array<i32>} : memref<8x1xf32, #tpu.memory_space<vmem>>, vector<8x1xf32>,
    %c0_i32_24 = arith.constant 0 : i32
    %43 = arith.cmpi eq, %arg1, %c0_i32_24 : i32
    %44 = arith.extui %43 : i1 to i32
    %c0_i32_25 = arith.constant 0 : i32
    %45 = arith.cmpi ne, %44, %c0_i32_25 : i32
    scf.if %45 {
      %c8_i32 = arith.constant 8 : i32
      %51 = arith.muli %arg0, %c8_i32 : i32
      %52 = tpu.iota {dimensions = array<i32: 0>} : vector<8x1xi32>
      %53 = vector.broadcast %51 : i32 to vector<8x1xi32>
      %54 = arith.addi %53, %52 : vector<8x1xi32>
      %c8_i32_29 = arith.constant 8 : i32
      %55 = vector.broadcast %c8_i32_29 : i32 to vector<8x1xi32>
      %56 = arith.cmpi slt, %54, %55 : vector<8x1xi32>
      %c0_30 = arith.constant 0 : index
      %c0_31 = arith.constant 0 : index
      %57 = vector.load %arg6[%c0_30, %c0_31] : memref<8x1xf32, #tpu.memory_space<vmem>>, vector<8x1xf32>
      %c0_32 = arith.constant 0 : index
      %c0_33 = arith.constant 0 : index
      %58 = vector.load %arg7[%c0_32, %c0_33] : memref<8x1xf32, #tpu.memory_space<vmem>>, vector<8x1xf32>
      %59 = math.log %58 : vector<8x1xf32>
      %60 = arith.addf %57, %59 : vector<8x1xf32>
      %c0_34 = arith.constant 0 : index
      %c0_35 = arith.constant 0 : index
      %61 = vector.load %arg8[%c0_34, %c0_35] : memref<8x1xf32, #tpu.memory_space<vmem>>, vector<8x1xf32>
      %62 = arith.subf %60, %61 : vector<8x1xf32>
      %c0_36 = arith.constant 0 : index
      %c0_37 = arith.constant 0 : index
      %63 = vector.load %arg4[%c0_36, %c0_37] : memref<8x1xf32, #tpu.memory_space<vmem>>, vector<8x1xf32>
      %c0_38 = arith.constant 0 : index
      %c0_39 = arith.constant 0 : index
      %64 = vector.load %arg9[%c0_38, %c0_39] : memref<8x1xf32, #tpu.memory_space<vmem>>, vector<8x1xf32>
      %65 = arith.mulf %63, %62 : vector<8x1xf32>
      %cst_40 = arith.constant 0.000000e+00 : f32
      %66 = vector.broadcast %cst_40 : f32 to vector<8x1xf32>
      %67 = arith.select %56, %65, %66 : vector<8x1xi1>, vector<8x1xf32>
      %68 = arith.addf %64, %67 : vector<8x1xf32>
      %c0_41 = arith.constant 0 : index
      %c0_42 = arith.constant 0 : index
      %69 = vector.load %arg9[%c0_41, %c0_42] : memref<8x1xf32, #tpu.memory_space<vmem>>, vector<8x1xf32>
      tpu.vector_store %arg9[%c0_41, %c0_42], %68 {strides = array<i32>} : memref<8x1xf32, #tpu.memory_space<vmem>>, vector<8x1xf32>,
      %c0_43 = arith.constant 0 : index
      %c0_44 = arith.constant 0 : index
      %70 = vector.load %arg10[%c0_43, %c0_44] : memref<8x1xf32, #tpu.memory_space<vmem>>, vector<8x1xf32>
      %cst_45 = arith.constant 0.000000e+00 : f32
      %71 = vector.broadcast %cst_45 : f32 to vector<8x1xf32>
      %72 = arith.select %56, %63, %71 : vector<8x1xi1>, vector<8x1xf32>
      %73 = arith.addf %70, %72 : vector<8x1xf32>
      %c0_46 = arith.constant 0 : index
      %c0_47 = arith.constant 0 : index
      %74 = vector.load %arg10[%c0_46, %c0_47] : memref<8x1xf32, #tpu.memory_space<vmem>>, vector<8x1xf32>
      tpu.vector_store %arg10[%c0_46, %c0_47], %73 {strides = array<i32>} : memref<8x1xf32, #tpu.memory_space<vmem>>, vector<8x1xf32>,
    } else {
    }
    %c0_i32_26 = arith.constant 0 : i32
    %46 = arith.cmpi eq, %arg0, %c0_i32_26 : i32
    %c0_i32_27 = arith.constant 0 : i32
    %47 = arith.cmpi eq, %arg1, %c0_i32_27 : i32
    %48 = arith.andi %46, %47 : i1
    %49 = arith.extui %48 : i1 to i32
    %c0_i32_28 = arith.constant 0 : i32
    %50 = arith.cmpi ne, %49, %c0_i32_28 : i32
    scf.if %50 {
      %c0_29 = arith.constant 0 : index
      %c0_30 = arith.constant 0 : index
      %51 = vector.load %arg9[%c0_29, %c0_30] : memref<8x1xf32, #tpu.memory_space<vmem>>, vector<8x1xf32>
      %cst_31 = arith.constant dense<0.000000e+00> : vector<1xf32>
      %52 = vector.multi_reduction <add>, %51, %cst_31 [0] : vector<8x1xf32> to vector<1xf32>
      %53 = vector.shape_cast %52 : vector<1xf32> to vector<1x1xf32>
      %c0_32 = arith.constant 0 : index
      %c0_33 = arith.constant 0 : index
      %54 = vector.load %arg10[%c0_32, %c0_33] : memref<8x1xf32, #tpu.memory_space<vmem>>, vector<8x1xf32>
      %cst_34 = arith.constant dense<0.000000e+00> : vector<1xf32>
      %55 = vector.multi_reduction <add>, %54, %cst_34 [0] : vector<8x1xf32> to vector<1xf32>
      %56 = vector.shape_cast %55 : vector<1xf32> to vector<1x1xf32>
      %57 = arith.divf %53, %56 : vector<1x1xf32>
      %c0_35 = arith.constant 0 : index
      %c0_36 = arith.constant 0 : index
      %58 = vector.load %arg5[%c0_35, %c0_36] : memref<1x1xf32, #tpu.memory_space<vmem>>, vector<1x1xf32>
      tpu.vector_store %arg5[%c0_35, %c0_36], %57 {strides = array<i32>} : memref<1x1xf32, #tpu.memory_space<vmem>>, vector<1x1xf32>,
    } else {
    }
    return
  }
  func.func @transform_0(%arg0: i32, %arg1: i32) -> (i32, i32) {
    %c0_i32 = arith.constant 0 : i32
    return %arg0, %arg1 : i32, i32
  }
  func.func @transform_1(%arg0: i32, %arg1: i32) -> (i32, i32) {
    %c0_i32 = arith.constant 0 : i32
    %c0_i32_0 = arith.constant 0 : i32
    return %arg0, %c0_i32 : i32, i32
  }
  func.func @transform_2(%arg0: i32, %arg1: i32) -> (i32, i32) {
    %c0_i32 = arith.constant 0 : i32
    %c0_i32_0 = arith.constant 0 : i32
    return %arg0, %c0_i32 : i32, i32
  }
  func.func @transform_3(%arg0: i32, %arg1: i32) -> (i32, i32) {
    %c0_i32 = arith.constant 0 : i32
    %c0_i32_0 = arith.constant 0 : i32
    %c0_i32_1 = arith.constant 0 : i32
    return %c0_i32, %c0_i32_0 : i32, i32
  }
}

</mosaic_0001>

<llo_original>
// kernel: tpu_custom_call.1
$region0: #{tpu_custom_call.1}
  #allocation0 [shape = 'u32[]', space=smem, size = 0x4, offset = 0x4, fixed_abs, tag = 'smem constant byte address 0x4 - core index']
  #allocation1 [shape = 'u32[144,128]{1,0:T(1,128)}', space=vmem, size = 0x12000, scoped, tag = 'internal scratch']
  #allocation2 [shape = 'f32[8,1]{1,0:T(8,128)}', space=vmem, size = 0x1000, scoped, tag = 'scratch operand']
  #allocation3 [shape = 'f32[8,1]{1,0:T(8,128)}', space=vmem, size = 0x1000, scoped, tag = 'scratch operand']
  #allocation4 [shape = 'f32[8,1]{1,0:T(8,128)}', space=vmem, size = 0x1000, scoped, tag = 'scratch operand']
  #allocation5 [shape = 'f32[8,1]{1,0:T(8,128)}', space=vmem, size = 0x1000, scoped, tag = 'scratch operand']
  #allocation6 [shape = 'f32[8,1]{1,0:T(8,128)}', space=vmem, size = 0x1000, scoped, tag = 'scratch operand']
  %s0 = inlined_call_operand.vmem [shape: f32[8,16], index: 0, kind: input, shape index: {}]
  %s1 = inlined_call_operand.vmem [shape: s32[8,1], index: 1, kind: input, shape index: {}]
  %s2 = inlined_call_operand.vmem [shape: f32[8,1], index: 2, kind: input, shape index: {}]
  %s3 = inlined_call_operand.hbm [shape: f32[1,1], index: 3, kind: output, shape index: {}]
  %s4 = sld [smem:[#allocation0]]
  $region38: #{tpu_custom_call.1} parent=0
    _
  %s6 = ssub.s32 1, %s4
  %s7 = scalar_select 0, %s6, %s4
  $region1: #{tpu_custom_call.1} parent=0
    #allocation7 [shape = 'u8[512]{0}', space=vmem, size = 0x400, scoped, tag = 'output window, operand 0, single buffered']
    #allocation8 [shape = 's32[1]{0}', space=sflag, size = 0x4, scoped, tag = 'scoped memory for tpu_custom_call.1']
    %8 = vsyncpa [#allocation8], 0
    // Predicated region
    $region2: #{tpu_custom_call.1} parent=1 // pred_check
      _
    $region3: #{tpu_custom_call.1} parent=1 // pred_check_branch
      %10 = sbr.rel (0) target = $region5
    $region4: #{tpu_custom_call.1} parent=1 // pred_region
      _
    $region5: #{tpu_custom_call.1} parent=1 // pred_fallthru
      _
    // Predicated region
    $region6: #{tpu_custom_call.1} parent=1 // pred_check
      _
    $region7: #{tpu_custom_call.1} parent=1 // pred_check_branch
      %12 = sbr.rel (0) target = $region9
    $region8: #{tpu_custom_call.1} parent=1 // pred_region
      _
    $region9: #{tpu_custom_call.1} parent=1 // pred_fallthru
      _
    // Predicated region
    $region10: #{tpu_custom_call.1} parent=1 // pred_check
      _
    $region11: #{tpu_custom_call.1} parent=1 // pred_check_branch
      %14 = sbr.rel (0) target = $region13
    $region12: #{tpu_custom_call.1} parent=1 // pred_region
      _
    $region13: #{tpu_custom_call.1} parent=1 // pred_fallthru
      _
    %p15 = scmp.eq.s32.totalorder 0, 0
    %p16 = scmp.eq.s32.totalorder 0, 0
    %p17 = pnand %p15, %p16
    %p18 = pneg %p17
    // Predicated region
    $region14: #{tpu_custom_call.1} parent=1 // pred_check
      _
    $region15: #{tpu_custom_call.1} parent=1 // pred_check_branch
      %20 = sbr.rel (%p17) target = $region17
    $region16: #{tpu_custom_call.1} parent=1 // pred_region
      %vm21 = vcmask 7168
      %22 = vst.msk [vmem:[#allocation5] sm:$0xff] %vm21, 0.0
      %23 = vst.msk [vmem:[#allocation6] sm:$0xff] %vm21, 0.0
    $region17: #{tpu_custom_call.1} parent=1 // pred_fallthru
      _
    // Predicated region
    $region18: #{tpu_custom_call.1} parent=1 // pred_check
      %p24 = pneg %p16
    $region19: #{tpu_custom_call.1} parent=1 // pred_check_branch
      %26 = sbr.rel (%p24) target = $region21
    $region20: #{tpu_custom_call.1} parent=1 // pred_region
      %vm27 = vcmask 7168
      %28 = vst.msk [vmem:[#allocation2] sm:$0xff] %vm27, -inf
      %29 = vst.msk [vmem:[#allocation3] sm:$0xff] %vm27, 0.0
      %30 = vst.msk [vmem:[#allocation4] sm:$0xff] %vm27, 0.0
    $region21: #{tpu_custom_call.1} parent=1 // pred_fallthru
      _
    %v31 = vld [vmem:[%s0] sm:$0xff]
    %v32 = vld [vmem:[%s1] sm:$0xff]
    %s33 = smul.u32 0, 16
    %v34 = vlaneseq
    %v35 = vand.u32 %v34, 127
    %v36 = vstv %s33
    %v37 = vadd.s32 %v36, %v35
    %vm38 = vcmp.lt.s32.totalorder %v37, 16
    %v39 = vsel %vm38, %v31, -inf
    %v40 = vld [vmem:[#allocation2] sm:$0xff]
    %vm41 = vcmask 130048
    %v42 = vsel %vm41, %v39, -inf
    %43 = vmax.xlane.f32.xlu0 %v42
    %v44 = vpop.xlane.xlu0 %43
    %v45 = vmax.f32 %v40, %v44
    %v46 = vld [vmem:[#allocation3] sm:$0xff]
    %v47 = vsub.f32 %v40, %v45
    %v48 = vmul.f32 %v47, 1.442695
    %v49 = vpow.pop %v48
    %v50 = vmul.f32 %v46, %v49
    %52 = vset.pattern.permute.xlu0 0
    %53 = vperm.xlu0 %52, %v45
    %v54 = vpop.permute.xlu0 %53
    %v56 = vsub.f32 %v39, %v54
    %v57 = vmul.f32 %v56, 1.442695
    %v58 = vpow.pop %v57
    %v59 = vsel %vm41, %v58, 0.0
    %60 = vadd.xlane.f32.xlu0 %v59
    %v61 = vpop.xlane.xlu0 %60
    %v62 = vadd.f32 %v50, %v61
    %vm63 = vcmask 7168
    %64 = vst.msk [vmem:[#allocation3] sm:$0xff] %vm63, %v62
    %65 = vst.msk [vmem:[#allocation2] sm:$0xff] %vm63, %v45
    %v66 = vld [vmem:[#allocation4] sm:$0xff]
    %67 = vset.pattern.permute.xlu0 0
    %68 = vperm.xlu0 %67, %v32
    %v69 = vpop.permute.xlu0 %68
    %vm70 = vcmp.eq.s32.totalorder %v37, %v69
    %v71 = vsel %vm70, %v31, 0.0
    %v72 = vsel %vm41, %v71, 0.0
    %73 = vadd.xlane.f32.xlu0 %v72
    %v74 = vpop.xlane.xlu0 %73
    %v75 = vadd.f32 %v66, %v74
    %76 = vst.msk [vmem:[#allocation4] sm:$0xff] %vm63, %v75
    // Predicated region
    $region22: #{tpu_custom_call.1} parent=1 // pred_check
      %p77 = pneg %p16
    $region23: #{tpu_custom_call.1} parent=1 // pred_check_branch
      %79 = sbr.rel (%p77) target = $region25
    $region24: #{tpu_custom_call.1} parent=1 // pred_region
      %s80 = smul.u32 0, 8
      %v81 = vlaneseq
      %v82 = vshrl.u32 %v81, 7
      %v83 = vstv %s80
      %v84 = vadd.s32 %v83, %v82
      %vm85 = vcmp.lt.s32.totalorder %v84, 8
      %v86 = vld [vmem:[#allocation2] sm:$0xff]
      %v87 = vld [vmem:[#allocation3] sm:$0xff]
      %v88 = vlog2.pop %v87
      %v89 = vmul.f32 %v88, 0.6931472
      %v90 = vadd.f32 %v86, %v89
      %v91 = vld [vmem:[#allocation4] sm:$0xff]
      %v92 = vsub.f32 %v90, %v91
      %v93 = vld [vmem:[%s2] sm:$0xff]
      %v94 = vld [vmem:[#allocation5] sm:$0xff]
      %v95 = vmul.f32 %v93, %v92
      %v96 = vsel %vm85, %v95, 0.0
      %v97 = vadd.f32 %v94, %v96
      %98 = vst.msk [vmem:[#allocation5] sm:$0xff] %vm63, %v97
      %v99 = vld [vmem:[#allocation6] sm:$0xff]
      %v100 = vsel %vm85, %v93, 0.0
      %v101 = vadd.f32 %v99, %v100
      %102 = vst.msk [vmem:[#allocation6] sm:$0xff] %vm63, %v101
    $region25: #{tpu_custom_call.1} parent=1 // pred_fallthru
      _
    // Predicated region
    $region26: #{tpu_custom_call.1} parent=1 // pred_check
      _
    $region27: #{tpu_custom_call.1} parent=1 // pred_check_branch
      %104 = sbr.rel (%p17) target = $region29
    $region28: #{tpu_custom_call.1} parent=1 // pred_region
      %v105 = vld [vmem:[#allocation5] sm:$0xff]
      %v106 = vsel %vm63, %v105, 0.0
      %v107 = vrot.slane %v106, 4
      %v108 = vadd.f32 %v106, %v107
      %v109 = vrot.slane %v108, 2
      %v110 = vadd.f32 %v108, %v109
      %v111 = vrot.slane %v110, 1
      %v112 = vadd.f32 %v110, %v111
      %v113 = vld [vmem:[#allocation6] sm:$0xff]
      %v114 = vsel %vm63, %v113, 0.0
      %v115 = vrot.slane %v114, 4
      %v116 = vadd.f32 %v114, %v115
      %v117 = vrot.slane %v116, 2
      %v118 = vadd.f32 %v116, %v117
      %v119 = vrot.slane %v118, 1
      %v120 = vadd.f32 %v118, %v119
      %v121 = vrcp.pop %v120
      %v122 = vmul.f32 %v112, %v121
      %vm123 = vcmask 0
      %124 = vst.msk [vmem:[#allocation7] sm:$0x1] %vm123, %v122
    $region29: #{tpu_custom_call.1} parent=1 // pred_fallthru
      _
    // Predicated region
    $region30: #{tpu_custom_call.1} parent=1 // pred_check
      _
    $region31: #{tpu_custom_call.1} parent=1 // pred_check_branch
      %126 = sbr.rel (0) target = $region33
    $region32: #{tpu_custom_call.1} parent=1 // pred_region
      %s128 = ssub.s32 16, 16
      %129 = vsyncadd [#allocation8], %s128
      %s131 = sshll.u32 [#allocation7], 4
      %s132 = int_to_ptr.vmem [resolvable:$true] %s131
      %134 = dma.vmem_to_hbm [thread:$0]  %s132, 16, %s3, [#allocation8]
    $region33: #{tpu_custom_call.1} parent=1 // pred_fallthru
      _
    // Predicated region
    $region34: #{tpu_custom_call.1} parent=1 // pred_check
      _
    $region35: #{tpu_custom_call.1} parent=1 // pred_check_branch
      %136 = sbr.rel (0) target = $region37
    $region36: #{tpu_custom_call.1} parent=1 // pred_region
      %137 = dma.done [#allocation8], 16
    $region37: #{tpu_custom_call.1} parent=1 // pred_fallthru
      _
    %138 = vsyncpa [#allocation8], 1

</llo_original>
